<compile_context>
chip_gen: v6e
topology: v6e:2x2x1
jax: 0.10.0
libtpu: 0.0.40
codegen_flags: <defaults>
</compile_context>

<pallas_src>
import math

import jax
import jax.numpy as jnp
from jax.experimental import pallas as pl
from jax.experimental.pallas import tpu as pltpu

# ----- synthetic model dims (small, consistent with the forward's signature) -----
B = 2        # batch
C_IO = 4     # io channels of the diffusion latent (x)
C_CAT = 4    # input_concat_cond channels
T = 16       # sequence length
D = 32       # hidden width
DT = 32      # timestep-embedding width
DG = 32      # global_embed width
DC = 32      # cross_attn_cond feature dim
S = 8        # cross_attn_cond sequence length
C_IN = C_IO + C_CAT
K_FUSED = C_IN + DT + DG      # 72: fused [x | temb | gemb] feature width
OUT_PAD = 128                 # lane-dense kernel output width (sliced back to C_IO)


# ---------------------------------------------------------------------------
# Pallas kernel: one row-block of the (CFG-folded) token rows per grid step.
# ---------------------------------------------------------------------------
def _denoiser_kernel(xe_ref, gate_ref, mask_ref, cond_ref,
                     w_fused_ref, b_in_ref, wq_ref, wk_ref, wv_ref, wo_ref,
                     w_out_ref, b_out_ref, out_ref):
    d = wq_ref.shape[1]

    # Fused [x | temb | gemb] @ [w_in; w_t; w_g]: single MXU pass (K=72 fits one
    # 128-deep pass).  The uncond CFG rows carry zeroed gemb columns, so no weight
    # stacking or in-kernel branching is needed.
    h = (jnp.dot(xe_ref[...], w_fused_ref[...], preferred_element_type=jnp.float32)
         + b_in_ref[...])                                          # (RB, D) f32
    h = h * jax.nn.sigmoid(h)                                      # SiLU, f32 elementwise

    # Cross-attention over the batch-folded conditioning sequence (bf16 MXU operands).
    q = jnp.dot(h.astype(jnp.bfloat16), wq_ref[...],
                preferred_element_type=jnp.float32)                # (RB, D)
    k = jnp.dot(cond_ref[...], wk_ref[...],
                preferred_element_type=jnp.float32).astype(jnp.bfloat16)   # (BS, D)
    v = jnp.dot(cond_ref[...], wv_ref[...],
                preferred_element_type=jnp.float32).astype(jnp.bfloat16)   # (BS, D)

    s = jnp.einsum("td,sd->ts", q.astype(jnp.bfloat16), k,
                   preferred_element_type=jnp.float32) * (1.0 / math.sqrt(d))  # (RB, BS)

    # Precomputed additive mask (block-diagonal per-batch + key validity), f32 math.
    s = s + mask_ref[...]
    s = s - jnp.max(s, axis=-1, keepdims=True)
    p = jnp.exp(s)
    p = p * pl.reciprocal(jnp.sum(p, axis=-1, keepdims=True), approx=True)     # EUP divide
    attn = jnp.dot(p.astype(jnp.bfloat16), v, preferred_element_type=jnp.float32)  # (RB, D)

    # gate is 1.0 for conditional rows, 0.0 for the unconditional CFG copy -> the
    # attention contribution vanishes there, exactly equivalent to null cross-attn cond.
    h = h + gate_ref[...] * jnp.dot(attn.astype(jnp.bfloat16), wo_ref[...],
                                    preferred_element_type=jnp.float32)

    # Lane-dense zero-padded output projection -> unmasked 128-wide stores.
    out_ref[...] = (jnp.dot(h.astype(jnp.bfloat16), w_out_ref[...],
                            preferred_element_type=jnp.float32) + b_out_ref[...])


def _run_denoiser(xe, gate, mask, cond, w_fused, b_in, wq, wk, wv, wo, w_out, b_out,
                  *, num_row_blocks):
    m, k_fused = xe.shape
    bs, dc = cond.shape
    d = wq.shape[0]
    rb = m // num_row_blocks

    def rowblock(cols):
        return pl.BlockSpec((rb, cols), lambda i: (i, 0))

    def shared(shape):
        return pl.BlockSpec(tuple(shape), lambda i: (0, 0))

    flops = 2 * (m * k_fused * d        # fused input projection
                 + m * d * d            # q
                 + 2 * bs * dc * d      # k, v
                 + 2 * m * bs * d       # scores + p@v
                 + m * d * d            # attn output projection
                 + m * d * OUT_PAD)     # lane-dense output projection
    transcendentals = m * d + m * bs + m           # sigmoid + exp + reciprocal
    bytes_accessed = (xe.size * 2 + gate.size * 4 + mask.size * 4 + cond.size * 2
                      + (w_fused.size + wq.size + wk.size + wv.size + wo.size
                         + w_out.size) * 2
                      + (b_in.size + b_out.size) * 4
                      + m * OUT_PAD * 4)

    return pl.pallas_call(
        _denoiser_kernel,
        grid=(num_row_blocks,),
        in_specs=[
            rowblock(k_fused),        # fused [x|temb|gemb] rows (cond + uncond copies)
            rowblock(1),              # per-row attention gate (1 = cond, 0 = uncond)
            rowblock(bs),             # precomputed additive mask (block-diag + key mask)
            shared(cond.shape),       # (B*S, DC) conditioning tokens
            shared(w_fused.shape),    # [w_in; w_t; w_g]
            shared(b_in.shape),
            shared(wq.shape), shared(wk.shape), shared(wv.shape), shared(wo.shape),
            shared(w_out.shape),      # (D, 128) zero-padded
            shared(b_out.shape),      # (1, 128) zero-padded
        ],
        out_specs=pl.BlockSpec((rb, OUT_PAD), lambda i: (i, 0)),
        out_shape=jax.ShapeDtypeStruct((m, OUT_PAD), jnp.float32),
        compiler_params=pltpu.CompilerParams(dimension_semantics=("parallel",)),
        cost_estimate=pl.CostEstimate(flops=flops, transcendentals=transcendentals,
                                      bytes_accessed=bytes_accessed),
    )(xe, gate, mask, cond, w_fused, b_in, wq, wk, wv, wo, w_out, b_out)


def _default_row_blocks(m):
    """v7x has 2 TensorCores per chip: shard the row axis across them. v5e/v6e: 1."""
    n = 1
    try:
        kind = jax.devices()[0].device_kind.lower()
        if "v7" in kind:
            n = 2
    except Exception:
        n = 1
    if m % n != 0 or (m // n) % 8 != 0:
        n = 1
    return n


# ---------------------------------------------------------------------------
# Glue: params, timestep embedding, forward wrapper
# ---------------------------------------------------------------------------
def init_params(key):
    ks = jax.random.split(key, 9)

    def w(k, shape):
        return (jax.random.normal(k, shape, jnp.float32) * 0.02).astype(jnp.float32)

    return dict(
        w_in=w(ks[0], (C_IN, D)), b_in=jnp.zeros((1, D), jnp.float32),
        w_t=w(ks[1], (DT, D)), w_g=w(ks[2], (DG, D)),
        wq=w(ks[3], (D, D)), wk=w(ks[4], (D, D)),
        wv=w(ks[5], (D, D)), wo=w(ks[6], (D, D)),
        w_out=w(ks[7], (D, C_IO)), b_out=jnp.zeros((1, C_IO), jnp.float32),
    )


def timestep_embedding(t, dim):
    half = dim // 2
    freqs = jnp.exp(-math.log(10000.0) * jnp.arange(half, dtype=jnp.float32) / half)
    args = t.astype(jnp.float32)[:, None] * freqs[None, :]
    return jnp.concatenate([jnp.cos(args), jnp.sin(args)], axis=-1)   # (B, dim)


def conditioned_diffusion_forward(params, x, t,
                                  cross_attn_cond=None, cross_attn_mask=None,
                                  input_concat_cond=None, global_embed=None,
                                  prepend_cond=None, prepend_cond_mask=None,
                                  cfg_scale=1.0, cfg_dropout_prob=0.0,
                                  batch_cfg=False, rescale_cfg=False,
                                  rng=None):
    # x: (B, C_IO, T) in PyTorch NCL layout
    b, _, t_len = x.shape

    # concat in NCL first, then a single transpose to channels-last rows
    if input_concat_cond is not None:
        x_cat = jnp.concatenate([x, input_concat_cond], axis=1)
    else:
        x_cat = jnp.concatenate([x, jnp.zeros((b, C_CAT, t_len), x.dtype)], axis=1)
    x_tc = jnp.transpose(x_cat, (0, 2, 1)).reshape(b * t_len, C_IN)   # (B*T, C_IN)

    temb = timestep_embedding(t, DT)                                  # (B, DT)
    gemb = (jnp.zeros((b, DG), jnp.float32) if global_embed is None
            else global_embed.astype(jnp.float32))
    cond = (jnp.zeros((b, S, DC), jnp.float32) if cross_attn_cond is None
            else cross_attn_cond.astype(jnp.float32))
    s_len = cond.shape[1]

    # CFG dropout: independent Bernoulli per conditioning signal.
    if cfg_dropout_prob > 0.0:
        if rng is None:
            rng = jax.random.PRNGKey(0)
        r1, r2 = jax.random.split(rng)
        keep_c = jax.random.bernoulli(r1, 1.0 - cfg_dropout_prob, (b, 1, 1)).astype(jnp.float32)
        keep_g = jax.random.bernoulli(r2, 1.0 - cfg_dropout_prob, (b, 1)).astype(jnp.float32)
        cond = cond * keep_c
        gemb = gemb * keep_g

    # TODO(synk): prepend_cond / prepend_cond_mask are part of the interface but the
    # abstract base class never defines how they are consumed; not implemented here.

    do_cfg = (cfg_scale != 1.0)
    n_cfg = 2 if do_cfg else 1
    bt = b * t_len
    m_rows = n_cfg * bt

    # Fused kernel input [x | temb | gemb]; the uncond CFG copy zeroes the gemb columns
    # (equivalent to null global conditioning) — CFG is folded into the ROW axis.
    temb_b = jnp.broadcast_to(temb[:, None, :], (b, t_len, DT)).reshape(bt, DT)
    gemb_b = jnp.broadcast_to(gemb[:, None, :], (b, t_len, DG)).reshape(bt, DG)
    xe_c = jnp.concatenate([x_tc.astype(jnp.float32), temb_b, gemb_b], axis=-1)   # (BT, 72)
    if do_cfg:
        xe_u = jnp.concatenate([x_tc.astype(jnp.float32), temb_b,
                                jnp.zeros_like(gemb_b)], axis=-1)
        xe = jnp.concatenate([xe_c, xe_u], axis=0)                    # (2*BT, 72)
        gate = jnp.concatenate([jnp.ones((bt, 1), jnp.float32),
                                jnp.zeros((bt, 1), jnp.float32)], axis=0)
    else:
        xe = xe_c
        gate = jnp.ones((bt, 1), jnp.float32)
    xe = xe.astype(jnp.bfloat16)

    cond_flat = cond.reshape(b * s_len, DC).astype(jnp.bfloat16)      # (B*S, DC)

    # Combined additive attention mask: per-batch block-diagonal + key validity,
    # precomputed once in the wrapper (kernel does a single add).
    row_batch = (jnp.arange(m_rows) % bt) // t_len                    # (M,)
    col_batch = jnp.arange(b * s_len) // s_len                        # (B*S,)
    blockdiag = jnp.where(row_batch[:, None] == col_batch[None, :], 0.0, -1e9)
    if cross_attn_mask is None:
        keyadd = jnp.zeros((1, b * s_len), jnp.float32)
    else:
        keyadd = jnp.where(cross_attn_mask.reshape(1, -1), 0.0, -1e9).astype(jnp.float32)
    mask = (blockdiag + keyadd).astype(jnp.float32)                   # (M, B*S)

    # Single fused input weight; wk / wv kept separate (lane-aligned, one MXU pass each).
    w_fused = jnp.concatenate([params["w_in"], params["w_t"], params["w_g"]], axis=0)
    w_out_p = jnp.pad(params["w_out"], ((0, 0), (0, OUT_PAD - C_IO)))  # lane-dense out
    b_out_p = jnp.pad(params["b_out"], ((0, 0), (0, OUT_PAD - C_IO)))

    num_row_blocks = _default_row_blocks(m_rows)

    out = _run_denoiser(xe, gate, mask, cond_flat,
                        w_fused.astype(jnp.bfloat16), params["b_in"],
                        params["wq"].astype(jnp.bfloat16),
                        params["wk"].astype(jnp.bfloat16),
                        params["wv"].astype(jnp.bfloat16),
                        params["wo"].astype(jnp.bfloat16),
                        w_out_p.astype(jnp.bfloat16), b_out_p,
                        num_row_blocks=num_row_blocks)                 # (M, 128)

    out = out[:, :C_IO].reshape(n_cfg, b, t_len, C_IO)

    if do_cfg:
        cond_out, uncond_out = out[0], out[1]
        y = uncond_out + (cond_out - uncond_out) * cfg_scale           # CFG combine (XLA-fused)
        if rescale_cfg:
            cond_std = jnp.std(cond_out, axis=(1, 2), keepdims=True)
            y_std = jnp.std(y, axis=(1, 2), keepdims=True)
            y = y * (cond_std / (y_std + 1e-8))
    else:
        y = out[0]

    return jnp.transpose(y, (0, 2, 1))                                 # back to (B, C_IO, T)


if __name__ == "__main__":
    key = jax.random.PRNGKey(0)
    kp, kx, kt, kc, kg, ki = jax.random.split(key, 6)
    params = init_params(kp)

    x = jax.random.normal(kx, (B, C_IO, T), jnp.float32)
    t = jax.random.uniform(kt, (B,), jnp.float32)
    cross_attn_cond = jax.random.normal(kc, (B, S, DC), jnp.float32)
    cross_attn_mask = jnp.ones((B, S), jnp.bool_)
    input_concat_cond = jax.random.normal(ki, (B, C_CAT, T), jnp.float32)
    global_embed = jax.random.normal(kg, (B, DG), jnp.float32)

    fwd = jax.jit(conditioned_diffusion_forward,
                  static_argnames=("cfg_scale", "cfg_dropout_prob",
                                   "batch_cfg", "rescale_cfg"))
    out = fwd(params, x, t,
              cross_attn_cond=cross_attn_cond,
              cross_attn_mask=cross_attn_mask,
              input_concat_cond=input_concat_cond,
              global_embed=global_embed,
              cfg_scale=3.0, cfg_dropout_prob=0.0,
              batch_cfg=True, rescale_cfg=True)
    out = jax.block_until_ready(out)
    assert out.shape == (B, C_IO, T) and out.dtype == jnp.float32
    print("KERNEL_OK")
</pallas_src>

<mosaic_0001>
module attributes {stable_mosaic.version = 11 : i64} {
  func.func @_denoiser_kernel(%arg0: i32, %arg1: memref<64x72xbf16, #tpu.memory_space<vmem>>, %arg2: memref<64x1xf32, #tpu.memory_space<vmem>>, %arg3: memref<64x16xf32, #tpu.memory_space<vmem>>, %arg4: memref<16x32xbf16, #tpu.memory_space<vmem>>, %arg5: memref<72x32xbf16, #tpu.memory_space<vmem>>, %arg6: memref<1x32xf32, #tpu.memory_space<vmem>>, %arg7: memref<32x32xbf16, #tpu.memory_space<vmem>>, %arg8: memref<32x32xbf16, #tpu.memory_space<vmem>>, %arg9: memref<32x32xbf16, #tpu.memory_space<vmem>>, %arg10: memref<32x32xbf16, #tpu.memory_space<vmem>>, %arg11: memref<32x128xbf16, #tpu.memory_space<vmem>>, %arg12: memref<1x128xf32, #tpu.memory_space<vmem>>, %arg13: memref<64x128xf32, #tpu.memory_space<vmem>>) attributes {dimension_semantics = [#tpu.dimension_semantics<parallel>], iteration_bounds = array<i64: 1>, scalar_prefetch = 0 : i64, scratch_operands = 0 : i64, tpu.core_type = #tpu.core_type<tc>, window_params = [{transform_indices = @transform_0, window_bounds = array<i64: 64, 72>}, {transform_indices = @transform_1, window_bounds = array<i64: 64, 1>}, {transform_indices = @transform_2, window_bounds = array<i64: 64, 16>}, {pipeline_mode = #tpu.pipeline_mode<synchronous>, transform_indices = @transform_3, window_bounds = array<i64: 16, 32>}, {pipeline_mode = #tpu.pipeline_mode<synchronous>, transform_indices = @transform_4, window_bounds = array<i64: 72, 32>}, {pipeline_mode = #tpu.pipeline_mode<synchronous>, transform_indices = @transform_5, window_bounds = array<i64: 1, 32>}, {pipeline_mode = #tpu.pipeline_mode<synchronous>, transform_indices = @transform_6, window_bounds = array<i64: 32, 32>}, {pipeline_mode = #tpu.pipeline_mode<synchronous>, transform_indices = @transform_7, window_bounds = array<i64: 32, 32>}, {pipeline_mode = #tpu.pipeline_mode<synchronous>, transform_indices = @transform_8, window_bounds = array<i64: 32, 32>}, {pipeline_mode = #tpu.pipeline_mode<synchronous>, transform_indices = @transform_9, window_bounds = array<i64: 32, 32>}, {pipeline_mode = #tpu.pipeline_mode<synchronous>, transform_indices = @transform_10, window_bounds = array<i64: 32, 128>}, {pipeline_mode = #tpu.pipeline_mode<synchronous>, transform_indices = @transform_11, window_bounds = array<i64: 1, 128>}, {transform_indices = @transform_12, window_bounds = array<i64: 64, 128>}]} {
    %c0 = arith.constant 0 : index
    %c0_0 = arith.constant 0 : index
    %0 = vector.load %arg1[%c0, %c0_0] : memref<64x72xbf16, #tpu.memory_space<vmem>>, vector<64x72xbf16>
    %c0_1 = arith.constant 0 : index
    %c0_2 = arith.constant 0 : index
    %1 = vector.load %arg5[%c0_1, %c0_2] : memref<72x32xbf16, #tpu.memory_space<vmem>>, vector<72x32xbf16>
    %cst = arith.constant dense<0.000000e+00> : vector<64x32xf32>
    %2 = tpu.matmul %0, %1, %cst {dimension_numbers = #tpu.dot_dimension_numbers<[1], [0], [0], [1], [0, 0, 1, 1], [], []>} : vector<64x72xbf16>, vector<72x32xbf16>, vector<64x32xf32> -> vector<64x32xf32>
    %c0_3 = arith.constant 0 : index
    %c0_4 = arith.constant 0 : index
    %3 = vector.load %arg6[%c0_3, %c0_4] : memref<1x32xf32, #tpu.memory_space<vmem>>, vector<1x32xf32>
    %4 = vector.broadcast %3 : vector<1x32xf32> to vector<64x32xf32>
    %5 = arith.addf %2, %4 : vector<64x32xf32>
    %6 = arith.negf %5 : vector<64x32xf32>
    %7 = math.exp %6 : vector<64x32xf32>
    %cst_5 = arith.constant 1.000000e+00 : f32
    %8 = vector.broadcast %cst_5 : f32 to vector<64x32xf32>
    %9 = arith.addf %8, %7 : vector<64x32xf32>
    %10 = arith.divf %8, %9 : vector<64x32xf32>
    %11 = arith.mulf %5, %10 : vector<64x32xf32>
    %12 = arith.truncf %11 : vector<64x32xf32> to vector<64x32xbf16>
    %c0_6 = arith.constant 0 : index
    %c0_7 = arith.constant 0 : index
    %13 = vector.load %arg7[%c0_6, %c0_7] : memref<32x32xbf16, #tpu.memory_space<vmem>>, vector<32x32xbf16>
    %cst_8 = arith.constant dense<0.000000e+00> : vector<64x32xf32>
    %14 = tpu.matmul %12, %13, %cst_8 {dimension_numbers = #tpu.dot_dimension_numbers<[1], [0], [0], [1], [0, 0, 1, 1], [], []>} : vector<64x32xbf16>, vector<32x32xbf16>, vector<64x32xf32> -> vector<64x32xf32>
    %c0_9 = arith.constant 0 : index
    %c0_10 = arith.constant 0 : index
    %15 = vector.load %arg4[%c0_9, %c0_10] : memref<16x32xbf16, #tpu.memory_space<vmem>>, vector<16x32xbf16>
    %c0_11 = arith.constant 0 : index
    %c0_12 = arith.constant 0 : index
    %16 = vector.load %arg8[%c0_11, %c0_12] : memref<32x32xbf16, #tpu.memory_space<vmem>>, vector<32x32xbf16>
    %cst_13 = arith.constant dense<0.000000e+00> : vector<16x32xf32>
    %17 = tpu.matmul %15, %16, %cst_13 {dimension_numbers = #tpu.dot_dimension_numbers<[1], [0], [0], [1], [0, 0, 1, 1], [], []>} : vector<16x32xbf16>, vector<32x32xbf16>, vector<16x32xf32> -> vector<16x32xf32>
    %18 = arith.truncf %17 : vector<16x32xf32> to vector<16x32xbf16>
    %c0_14 = arith.constant 0 : index
    %c0_15 = arith.constant 0 : index
    %19 = vector.load %arg4[%c0_14, %c0_15] : memref<16x32xbf16, #tpu.memory_space<vmem>>, vector<16x32xbf16>
    %c0_16 = arith.constant 0 : index
    %c0_17 = arith.constant 0 : index
    %20 = vector.load %arg9[%c0_16, %c0_17] : memref<32x32xbf16, #tpu.memory_space<vmem>>, vector<32x32xbf16>
    %cst_18 = arith.constant dense<0.000000e+00> : vector<16x32xf32>
    %21 = tpu.matmul %19, %20, %cst_18 {dimension_numbers = #tpu.dot_dimension_numbers<[1], [0], [0], [1], [0, 0, 1, 1], [], []>} : vector<16x32xbf16>, vector<32x32xbf16>, vector<16x32xf32> -> vector<16x32xf32>
    %22 = arith.truncf %21 : vector<16x32xf32> to vector<16x32xbf16>
    %23 = arith.truncf %14 : vector<64x32xf32> to vector<64x32xbf16>
    "tpu.trace_start"() <{level = 10 : i32, message = "td,sd->ts"}> : () -> ()
    %cst_19 = arith.constant dense<0.000000e+00> : vector<64x16xf32>
    %24 = tpu.matmul %23, %18, %cst_19 {dimension_numbers = #tpu.dot_dimension_numbers<[1], [1], [0], [0], [0, 0, 1, 0], [], []>} : vector<64x32xbf16>, vector<16x32xbf16>, vector<64x16xf32> -> vector<64x16xf32>
    "tpu.trace_stop"() : () -> ()
    %cst_20 = arith.constant 0.176776692 : f32
    %25 = vector.broadcast %cst_20 : f32 to vector<64x16xf32>
    %26 = arith.mulf %24, %25 : vector<64x16xf32>
    %c0_21 = arith.constant 0 : index
    %c0_22 = arith.constant 0 : index
    %27 = vector.load %arg3[%c0_21, %c0_22] : memref<64x16xf32, #tpu.memory_space<vmem>>, vector<64x16xf32>
    %28 = arith.addf %26, %27 : vector<64x16xf32>
    %cst_23 = arith.constant dense<0xFF800000> : vector<64xf32>
    %29 = vector.multi_reduction <maximumf>, %28, %cst_23 [1] : vector<64x16xf32> to vector<64xf32>
    %30 = vector.shape_cast %29 : vector<64xf32> to vector<64x1xf32>
    %31 = vector.broadcast %30 : vector<64x1xf32> to vector<64x16xf32>
    %32 = arith.subf %28, %31 : vector<64x16xf32>
    %33 = math.exp %32 : vector<64x16xf32>
    %cst_24 = arith.constant dense<0.000000e+00> : vector<64xf32>
    %34 = vector.multi_reduction <add>, %33, %cst_24 [1] : vector<64x16xf32> to vector<64xf32>
    %35 = vector.shape_cast %34 : vector<64xf32> to vector<64x1xf32>
    %36 = tpu.reciprocal %35 {approx = true} : vector<64x1xf32> -> vector<64x1xf32>
    %37 = vector.broadcast %36 : vector<64x1xf32> to vector<64x16xf32>
    %38 = arith.mulf %33, %37 : vector<64x16xf32>
    %39 = arith.truncf %38 : vector<64x16xf32> to vector<64x16xbf16>
    %cst_25 = arith.constant dense<0.000000e+00> : vector<64x32xf32>
    %40 = tpu.matmul %39, %22, %cst_25 {dimension_numbers = #tpu.dot_dimension_numbers<[1], [0], [0], [1], [0, 0, 1, 1], [], []>} : vector<64x16xbf16>, vector<16x32xbf16>, vector<64x32xf32> -> vector<64x32xf32>
    %c0_26 = arith.constant 0 : index
    %c0_27 = arith.constant 0 : index
    %41 = vector.load %arg2[%c0_26, %c0_27] : memref<64x1xf32, #tpu.memory_space<vmem>>, vector<64x1xf32>
    %42 = arith.truncf %40 : vector<64x32xf32> to vector<64x32xbf16>
    %c0_28 = arith.constant 0 : index
    %c0_29 = arith.constant 0 : index
    %43 = vector.load %arg10[%c0_28, %c0_29] : memref<32x32xbf16, #tpu.memory_space<vmem>>, vector<32x32xbf16>
    %cst_30 = arith.constant dense<0.000000e+00> : vector<64x32xf32>
    %44 = tpu.matmul %42, %43, %cst_30 {dimension_numbers = #tpu.dot_dimension_numbers<[1], [0], [0], [1], [0, 0, 1, 1], [], []>} : vector<64x32xbf16>, vector<32x32xbf16>, vector<64x32xf32> -> vector<64x32xf32>
    %45 = vector.broadcast %41 : vector<64x1xf32> to vector<64x32xf32>
    %46 = arith.mulf %45, %44 : vector<64x32xf32>
    %47 = arith.addf %11, %46 : vector<64x32xf32>
    %48 = arith.truncf %47 : vector<64x32xf32> to vector<64x32xbf16>
    %c0_31 = arith.constant 0 : index
    %c0_32 = arith.constant 0 : index
    %49 = vector.load %arg11[%c0_31, %c0_32] : memref<32x128xbf16, #tpu.memory_space<vmem>>, vector<32x128xbf16>
    %cst_33 = arith.constant dense<0.000000e+00> : vector<64x128xf32>
    %50 = tpu.matmul %48, %49, %cst_33 {dimension_numbers = #tpu.dot_dimension_numbers<[1], [0], [0], [1], [0, 0, 1, 1], [], []>} : vector<64x32xbf16>, vector<32x128xbf16>, vector<64x128xf32> -> vector<64x128xf32>
    %c0_34 = arith.constant 0 : index
    %c0_35 = arith.constant 0 : index
    %51 = vector.load %arg12[%c0_34, %c0_35] : memref<1x128xf32, #tpu.memory_space<vmem>>, vector<1x128xf32>
    %52 = vector.broadcast %51 : vector<1x128xf32> to vector<64x128xf32>
    %53 = arith.addf %50, %52 : vector<64x128xf32>
    %c0_36 = arith.constant 0 : index
    %c0_37 = arith.constant 0 : index
    %54 = vector.load %arg13[%c0_36, %c0_37] : memref<64x128xf32, #tpu.memory_space<vmem>>, vector<64x128xf32>
    tpu.vector_store %arg13[%c0_36, %c0_37], %53 {strides = array<i32>} : memref<64x128xf32, #tpu.memory_space<vmem>>, vector<64x128xf32>,
    return
  }
  func.func @transform_0(%arg0: i32) -> (i32, i32) {
    %c0_i32 = arith.constant 0 : i32
    %c0_i32_0 = arith.constant 0 : i32
    return %arg0, %c0_i32 : i32, i32
  }
  func.func @transform_1(%arg0: i32) -> (i32, i32) {
    %c0_i32 = arith.constant 0 : i32
    %c0_i32_0 = arith.constant 0 : i32
    return %arg0, %c0_i32 : i32, i32
  }
  func.func @transform_2(%arg0: i32) -> (i32, i32) {
    %c0_i32 = arith.constant 0 : i32
    %c0_i32_0 = arith.constant 0 : i32
    return %arg0, %c0_i32 : i32, i32
  }
  func.func @transform_3(%arg0: i32) -> (i32, i32) {
    %c0_i32 = arith.constant 0 : i32
    %c0_i32_0 = arith.constant 0 : i32
    %c0_i32_1 = arith.constant 0 : i32
    return %c0_i32, %c0_i32_0 : i32, i32
  }
  func.func @transform_4(%arg0: i32) -> (i32, i32) {
    %c0_i32 = arith.constant 0 : i32
    %c0_i32_0 = arith.constant 0 : i32
    %c0_i32_1 = arith.constant 0 : i32
    return %c0_i32, %c0_i32_0 : i32, i32
  }
  func.func @transform_5(%arg0: i32) -> (i32, i32) {
    %c0_i32 = arith.constant 0 : i32
    %c0_i32_0 = arith.constant 0 : i32
    %c0_i32_1 = arith.constant 0 : i32
    return %c0_i32, %c0_i32_0 : i32, i32
  }
  func.func @transform_6(%arg0: i32) -> (i32, i32) {
    %c0_i32 = arith.constant 0 : i32
    %c0_i32_0 = arith.constant 0 : i32
    %c0_i32_1 = arith.constant 0 : i32
    return %c0_i32, %c0_i32_0 : i32, i32
  }
  func.func @transform_7(%arg0: i32) -> (i32, i32) {
    %c0_i32 = arith.constant 0 : i32
    %c0_i32_0 = arith.constant 0 : i32
    %c0_i32_1 = arith.constant 0 : i32
    return %c0_i32, %c0_i32_0 : i32, i32
  }
  func.func @transform_8(%arg0: i32) -> (i32, i32) {
    %c0_i32 = arith.constant 0 : i32
    %c0_i32_0 = arith.constant 0 : i32
    %c0_i32_1 = arith.constant 0 : i32
    return %c0_i32, %c0_i32_0 : i32, i32
  }
  func.func @transform_9(%arg0: i32) -> (i32, i32) {
    %c0_i32 = arith.constant 0 : i32
    %c0_i32_0 = arith.constant 0 : i32
    %c0_i32_1 = arith.constant 0 : i32
    return %c0_i32, %c0_i32_0 : i32, i32
  }
  func.func @transform_10(%arg0: i32) -> (i32, i32) {
    %c0_i32 = arith.constant 0 : i32
    %c0_i32_0 = arith.constant 0 : i32
    %c0_i32_1 = arith.constant 0 : i32
    return %c0_i32, %c0_i32_0 : i32, i32
  }
  func.func @transform_11(%arg0: i32) -> (i32, i32) {
    %c0_i32 = arith.constant 0 : i32
    %c0_i32_0 = arith.constant 0 : i32
    %c0_i32_1 = arith.constant 0 : i32
    return %c0_i32, %c0_i32_0 : i32, i32
  }
  func.func @transform_12(%arg0: i32) -> (i32, i32) {
    %c0_i32 = arith.constant 0 : i32
    %c0_i32_0 = arith.constant 0 : i32
    return %arg0, %c0_i32 : i32, i32
  }
}

</mosaic_0001>

<llo_original>
// kernel: conditioned_diffusion_forward.1
$region0: #{conditioned_diffusion_forward.1}
  #allocation0 [shape = 'u32[]', space=smem, size = 0x4, offset = 0x4, fixed_abs, tag = 'smem constant byte address 0x4 - core index']
  #allocation1 [shape = 'u32[144,128]{1,0:T(1,128)}', space=vmem, size = 0x12000, scoped, tag = 'internal scratch']
  %s0 = inlined_call_operand.vmem [shape: bf16[64,72], index: 0, kind: input, shape index: {}]
  %s1 = inlined_call_operand.vmem [shape: f32[64,1], index: 1, kind: input, shape index: {}]
  %s2 = inlined_call_operand.vmem [shape: f32[64,16], index: 2, kind: input, shape index: {}]
  %s3 = inlined_call_operand.vmem [shape: bf16[16,32], index: 3, kind: input, shape index: {}]
  %s4 = inlined_call_operand.vmem [shape: bf16[72,32], index: 4, kind: input, shape index: {}]
  %s5 = inlined_call_operand.vmem [shape: f32[1,32], index: 5, kind: input, shape index: {}]
  %s6 = inlined_call_operand.vmem [shape: bf16[32,32], index: 6, kind: input, shape index: {}]
  %s7 = inlined_call_operand.vmem [shape: bf16[32,32], index: 7, kind: input, shape index: {}]
  %s8 = inlined_call_operand.vmem [shape: bf16[32,32], index: 8, kind: input, shape index: {}]
  %s9 = inlined_call_operand.vmem [shape: bf16[32,32], index: 9, kind: input, shape index: {}]
  %s10 = inlined_call_operand.vmem [shape: bf16[32,128], index: 10, kind: input, shape index: {}]
  %s11 = inlined_call_operand.vmem [shape: f32[1,128], index: 11, kind: input, shape index: {}]
  %s12 = inlined_call_operand.vmem [shape: f32[64,128], index: 12, kind: output, shape index: {}]
  %s13 = sld [smem:[#allocation0]]
  $region58: #{conditioned_diffusion_forward.1} parent=0
    _
  %s15 = ssub.s32 1, %s13
  %s16 = scalar_select 0, %s15, %s13
  // Predicated region
  $region2: #{conditioned_diffusion_forward.1} parent=0 // pred_check
    _
  $region3: #{conditioned_diffusion_forward.1} parent=0 // pred_check_branch
    %18 = sbr.rel (0) target = $region5
  $region4: #{conditioned_diffusion_forward.1} parent=0 // pred_region
    _
  $region5: #{conditioned_diffusion_forward.1} parent=0 // pred_fallthru
    _
  // Predicated region
  $region6: #{conditioned_diffusion_forward.1} parent=0 // pred_check
    _
  $region7: #{conditioned_diffusion_forward.1} parent=0 // pred_check_branch
    %20 = sbr.rel (0) target = $region9
  $region8: #{conditioned_diffusion_forward.1} parent=0 // pred_region
    _
  $region9: #{conditioned_diffusion_forward.1} parent=0 // pred_fallthru
    _
  // Predicated region
  $region10: #{conditioned_diffusion_forward.1} parent=0 // pred_check
    _
  $region11: #{conditioned_diffusion_forward.1} parent=0 // pred_check_branch
    %22 = sbr.rel (0) target = $region13
  $region12: #{conditioned_diffusion_forward.1} parent=0 // pred_region
    _
  $region13: #{conditioned_diffusion_forward.1} parent=0 // pred_fallthru
    _
  // Predicated region
  $region14: #{conditioned_diffusion_forward.1} parent=0 // pred_check
    _
  $region15: #{conditioned_diffusion_forward.1} parent=0 // pred_check_branch
    %24 = sbr.rel (0) target = $region17
  $region16: #{conditioned_diffusion_forward.1} parent=0 // pred_region
    _
  $region17: #{conditioned_diffusion_forward.1} parent=0 // pred_fallthru
    _
  // Predicated region
  $region18: #{conditioned_diffusion_forward.1} parent=0 // pred_check
    _
  $region19: #{conditioned_diffusion_forward.1} parent=0 // pred_check_branch
    %26 = sbr.rel (0) target = $region21
  $region20: #{conditioned_diffusion_forward.1} parent=0 // pred_region
    _
  $region21: #{conditioned_diffusion_forward.1} parent=0 // pred_fallthru
    _
  // Predicated region
  $region22: #{conditioned_diffusion_forward.1} parent=0 // pred_check
    _
  $region23: #{conditioned_diffusion_forward.1} parent=0 // pred_check_branch
    %28 = sbr.rel (0) target = $region25
  $region24: #{conditioned_diffusion_forward.1} parent=0 // pred_region
    _
  $region25: #{conditioned_diffusion_forward.1} parent=0 // pred_fallthru
    _
  // Predicated region
  $region26: #{conditioned_diffusion_forward.1} parent=0 // pred_check
    _
  $region27: #{conditioned_diffusion_forward.1} parent=0 // pred_check_branch
    %30 = sbr.rel (0) target = $region29
  $region28: #{conditioned_diffusion_forward.1} parent=0 // pred_region
    _
  $region29: #{conditioned_diffusion_forward.1} parent=0 // pred_fallthru
    _
  // Predicated region
  $region30: #{conditioned_diffusion_forward.1} parent=0 // pred_check
    _
  $region31: #{conditioned_diffusion_forward.1} parent=0 // pred_check_branch
    %32 = sbr.rel (0) target = $region33
  $region32: #{conditioned_diffusion_forward.1} parent=0 // pred_region
    _
  $region33: #{conditioned_diffusion_forward.1} parent=0 // pred_fallthru
    _
  // Predicated region
  $region34: #{conditioned_diffusion_forward.1} parent=0 // pred_check
    _
  $region35: #{conditioned_diffusion_forward.1} parent=0 // pred_check_branch
    %34 = sbr.rel (0) target = $region37
  $region36: #{conditioned_diffusion_forward.1} parent=0 // pred_region
    _
  $region37: #{conditioned_diffusion_forward.1} parent=0 // pred_fallthru
    _
  // Predicated region
  $region38: #{conditioned_diffusion_forward.1} parent=0 // pred_check
    _
  $region39: #{conditioned_diffusion_forward.1} parent=0 // pred_check_branch
    %36 = sbr.rel (0) target = $region41
  $region40: #{conditioned_diffusion_forward.1} parent=0 // pred_region
    _
  $region41: #{conditioned_diffusion_forward.1} parent=0 // pred_fallthru
    _
  // Predicated region
  $region42: #{conditioned_diffusion_forward.1} parent=0 // pred_check
    _
  $region43: #{conditioned_diffusion_forward.1} parent=0 // pred_check_branch
    %38 = sbr.rel (0) target = $region45
  $region44: #{conditioned_diffusion_forward.1} parent=0 // pred_region
    _
  $region45: #{conditioned_diffusion_forward.1} parent=0 // pred_fallthru
    _
  // Predicated region
  $region46: #{conditioned_diffusion_forward.1} parent=0 // pred_check
    _
  $region47: #{conditioned_diffusion_forward.1} parent=0 // pred_check_branch
    %40 = sbr.rel (0) target = $region49
  $region48: #{conditioned_diffusion_forward.1} parent=0 // pred_region
    _
  $region49: #{conditioned_diffusion_forward.1} parent=0 // pred_fallthru
    _
  %v42 = vld [vmem:[%s0] sm:$0xf]
  %v43 = vld [vmem:[%s0 + $0x4] sm:$0xf]
  %v44 = vld [vmem:[%s0 + $0x8] sm:$0xf]
  %v45 = vld [vmem:[%s0 + $0xc] sm:$0xf]
  %v46 = vld [vmem:[%s0 + $0x10] sm:$0xf]
  %v47 = vld [vmem:[%s0 + $0x14] sm:$0xf]
  %v48 = vld [vmem:[%s0 + $0x18] sm:$0xf]
  %v49 = vld [vmem:[%s0 + $0x1c] sm:$0xf]
  %v50 = vld [vmem:[%s4] sm:$0xf]
  %v51 = vld [vmem:[%s4 + $0x4] sm:$0xf]
  %v52 = vld [vmem:[%s4 + $0x8] sm:$0xf]
  %v53 = vld [vmem:[%s4 + $0xc] sm:$0xf]
  %v54 = vld [vmem:[%s4 + $0x10] sm:$0xf]
  %v55 = vld [vmem:[%s4 + $0x14] sm:$0xf]
  %v56 = vld [vmem:[%s4 + $0x18] sm:$0xf]
  %v57 = vld [vmem:[%s4 + $0x1c] sm:$0xf]
  %v58 = vld [vmem:[%s4 + $0x20] sm:$0xf]
  %v59 = vld [vmem:[%s5] sm:$0x1]
  %v61 = vlaneseq
  %v62 = vshrl.u32 %v61, 7
  %v63 = vsub.s32 0, %v62
  %v64 = vrot.slane %v59, %v63
  %v74 = vunpack.c.l.b16 %v42
  %v75 = vunpack.c.l.b16 %v43
  %v76 = vunpack.c.l.b16 %v44
  %v77 = vunpack.c.l.b16 %v45
  %v78 = vunpack.c.l.b16 %v46
  %v79 = vunpack.c.l.b16 %v47
  %v80 = vunpack.c.l.b16 %v48
  %v81 = vunpack.c.l.b16 %v49
  %v82 = vpack.c.b16 %v75, %v74
  %v83 = vpack.c.b16 %v77, %v76
  %v84 = vpack.c.b16 %v79, %v78
  %v85 = vpack.c.b16 %v81, %v80
  %v95 = vunpack.c.l.b16 %v50
  %v96 = vunpack.c.l.b16 %v51
  %v97 = vunpack.c.l.b16 %v52
  %v98 = vunpack.c.l.b16 %v53
  %v99 = vunpack.c.l.b16 %v54
  %v100 = vunpack.c.l.b16 %v55
  %v101 = vunpack.c.l.b16 %v56
  %v102 = vunpack.c.l.b16 %v57
  %v103 = vunpack.c.l.b16 %v58
  %v104 = vpack.c.b16 %v96, %v95
  %v105 = vpack.c.b16 %v98, %v97
  %v106 = vpack.c.b16 %v100, %v99
  %v107 = vpack.c.b16 %v102, %v101
  %v108 = vpack.c.b16 %v103, %v103
  %vm113 = vcmask 588800
  %v115 = vsel %vm113, %v82, 0
  %v118 = vsel %vm113, %v83, 0
  %v121 = vsel %vm113, %v84, 0
  %v124 = vsel %vm113, %v85, 0
  %vm126 = vcmask 1043456
  %v128 = vsel %vm126, %v108, 0
  %130 = vmatprep.subr.bf16.mxu0 0
  %131 = vmatpush1.bf16.msra.mxu0 0
  %132 = vmatprep.subr.bf16.mxu0 0
  %133 = vmatpush1.bf16.msra.mxu0 0
  %134 = vmatprep.subr.bf16.mxu0 0
  %135 = vmatpush1.bf16.msra.mxu0 0
  %136 = vmatprep.subr.bf16.mxu0 0
  %137 = vmatpush1.bf16.msra.mxu0 %v128
  %138 = vmatprep.subr.bf16.mxu0 0
  %139 = vmatpush1.bf16.msra.mxu0 %v107
  %140 = vmatprep.subr.bf16.mxu0 0
  %141 = vmatpush1.bf16.msra.mxu0 %v106
  %142 = vmatprep.subr.bf16.mxu0 0
  %143 = vmatpush1.bf16.msra.mxu0 %v105
  %144 = vmatprep.subr.bf16.mxu0 0
  %145 = vmatpush1.bf16.msra.mxu0 %v104
  %146 = vmatprep.subr.bf16.mxu0 0
  %147 = vmatpush2.bf16.msra.mxu0 0
  %148 = vmatprep.subr.bf16.mxu0 0
  %149 = vmatpush2.bf16.msra.mxu0 0
  %150 = vmatprep.subr.bf16.mxu0 0
  %151 = vmatpush2.bf16.msra.mxu0 0
  %152 = vmatprep.subr.bf16.mxu0 0
  %153 = vmatpush2.bf16.msra.mxu0 0
  %154 = vmatprep.subr.bf16.mxu0 0
  %155 = vmatpush2.bf16.msra.mxu0 0
  %156 = vmatprep.subr.bf16.mxu0 0
  %157 = vmatpush2.bf16.msra.mxu0 0
  %158 = vmatprep.subr.bf16.mxu0 0
  %159 = vmatpush2.bf16.msra.mxu0 0
  %160 = vmatprep.subr.bf16.mxu0 0
  %161 = vmatpush2.bf16.msra.mxu0 0
  %162 = vmatprep.mubr.bf16.mxu0 0
  %163 = vmatmul.mubr.bf16.gmra.mxu0 %v115
  %v164 = vpop.f32.mrf.mxu0
  %v165 = vadd.f32 %v64, %v164
  %v166 = vpop.f32.mrf.mxu0
  %v167 = vpop.f32.mrf.mxu0
  %v168 = vadd.f32 %v64, %v167
  %v169 = vpop.f32.mrf.mxu0
  %170 = vmatprep.mubr.bf16.mxu0 0
  %171 = vmatmul.mubr.bf16.gmra.mxu0 %v118
  %v172 = vpop.f32.mrf.mxu0
  %v173 = vadd.f32 %v64, %v172
  %v174 = vpop.f32.mrf.mxu0
  %v175 = vpop.f32.mrf.mxu0
  %v176 = vadd.f32 %v64, %v175
  %v177 = vpop.f32.mrf.mxu0
  %178 = vmatprep.mubr.bf16.mxu0 0
  %179 = vmatmul.mubr.bf16.gmra.mxu0 %v121
  %v180 = vpop.f32.mrf.mxu0
  %v181 = vadd.f32 %v64, %v180
  %v182 = vpop.f32.mrf.mxu0
  %v183 = vpop.f32.mrf.mxu0
  %v184 = vadd.f32 %v64, %v183
  %v185 = vpop.f32.mrf.mxu0
  %186 = vmatprep.mubr.bf16.mxu0 0
  %187 = vmatmul.mubr.bf16.gmra.mxu0 %v124
  %v188 = vpop.f32.mrf.mxu0
  %v189 = vadd.f32 %v64, %v188
  %v190 = vpop.f32.mrf.mxu0
  %v191 = vpop.f32.mrf.mxu0
  %v192 = vadd.f32 %v64, %v191
  %v193 = vpop.f32.mrf.mxu0
  %194 = vdwg.mxu0
  %v195 = vxor.u32 %v165, 2147483648
  %v196 = vxor.u32 %v168, 2147483648
  %v197 = vxor.u32 %v173, 2147483648
  %v198 = vxor.u32 %v176, 2147483648
  %v199 = vxor.u32 %v181, 2147483648
  %v200 = vxor.u32 %v184, 2147483648
  %v201 = vxor.u32 %v189, 2147483648
  %v202 = vxor.u32 %v192, 2147483648
  %v203 = vmul.f32 %v195, 1.442695
  %v204 = vpow.pop %v203
  %v205 = vmul.f32 %v196, 1.442695
  %v206 = vpow.pop %v205
  %v207 = vmul.f32 %v197, 1.442695
  %v208 = vpow.pop %v207
  %v209 = vmul.f32 %v198, 1.442695
  %v210 = vpow.pop %v209
  %v211 = vmul.f32 %v199, 1.442695
  %v212 = vpow.pop %v211
  %v213 = vmul.f32 %v200, 1.442695
  %v214 = vpow.pop %v213
  %v215 = vmul.f32 %v201, 1.442695
  %v216 = vpow.pop %v215
  %v217 = vmul.f32 %v202, 1.442695
  %v218 = vpow.pop %v217
  %v219 = vadd.f32 %v204, 1.0
  %v220 = vadd.f32 %v206, 1.0
  %v221 = vadd.f32 %v208, 1.0
  %v222 = vadd.f32 %v210, 1.0
  %v223 = vadd.f32 %v212, 1.0
  %v224 = vadd.f32 %v214, 1.0
  %v225 = vadd.f32 %v216, 1.0
  %v226 = vadd.f32 %v218, 1.0
  %v227 = vrcp.pop %v219
  %v228 = vmul.f32 1.0, %v227
  %v229 = vrcp.pop %v220
  %v230 = vmul.f32 1.0, %v229
  %v231 = vrcp.pop %v221
  %v232 = vmul.f32 1.0, %v231
  %v233 = vrcp.pop %v222
  %v234 = vmul.f32 1.0, %v233
  %v235 = vrcp.pop %v223
  %v236 = vmul.f32 1.0, %v235
  %v237 = vrcp.pop %v224
  %v238 = vmul.f32 1.0, %v237
  %v239 = vrcp.pop %v225
  %v240 = vmul.f32 1.0, %v239
  %v241 = vrcp.pop %v226
  %v242 = vmul.f32 1.0, %v241
  %v243 = vmul.f32 %v165, %v228
  %v244 = vmul.f32 %v168, %v230
  %v245 = vmul.f32 %v173, %v232
  %v246 = vmul.f32 %v176, %v234
  %v247 = vmul.f32 %v181, %v236
  %v248 = vmul.f32 %v184, %v238
  %v249 = vmul.f32 %v189, %v240
  %v250 = vmul.f32 %v192, %v242
  %v251 = vpack.c.bf16 %v244, %v243
  %v252 = vpack.c.bf16 %v246, %v245
  %v253 = vpack.c.bf16 %v248, %v247
  %v254 = vpack.c.bf16 %v250, %v249
  %v255 = vld [vmem:[%s6] sm:$0xf]
  %v256 = vld [vmem:[%s6 + $0x4] sm:$0xf]
  %v257 = vld [vmem:[%s6 + $0x8] sm:$0xf]
  %v258 = vld [vmem:[%s6 + $0xc] sm:$0xf]
  %v263 = vunpack.c.l.b16 %v255
  %v264 = vunpack.c.l.b16 %v256
  %v265 = vunpack.c.l.b16 %v257
  %v266 = vunpack.c.l.b16 %v258
  %v267 = vpack.c.b16 %v264, %v263
  %v268 = vpack.c.b16 %v266, %v265
  %vm271 = vcmask 261120
  %v273 = vsel %vm271, %v251, 0
  %v276 = vsel %vm271, %v252, 0
  %v279 = vsel %vm271, %v253, 0
  %v282 = vsel %vm271, %v254, 0
  %284 = vmatprep.subr.bf16.mxu0 0
  %285 = vmatpush1.bf16.msra.mxu0 0
  %286 = vmatprep.subr.bf16.mxu0 0
  %287 = vmatpush1.bf16.msra.mxu0 0
  %288 = vmatprep.subr.bf16.mxu0 0
  %289 = vmatpush1.bf16.msra.mxu0 0
  %290 = vmatprep.subr.bf16.mxu0 0
  %291 = vmatpush1.bf16.msra.mxu0 0
  %292 = vmatprep.subr.bf16.mxu0 0
  %293 = vmatpush1.bf16.msra.mxu0 0
  %294 = vmatprep.subr.bf16.mxu0 0
  %295 = vmatpush1.bf16.msra.mxu0 0
  %296 = vmatprep.subr.bf16.mxu0 0
  %297 = vmatpush1.bf16.msra.mxu0 %v268
  %298 = vmatprep.subr.bf16.mxu0 0
  %299 = vmatpush1.bf16.msra.mxu0 %v267
  %300 = vmatprep.subr.bf16.mxu0 0
  %301 = vmatpush2.bf16.msra.mxu0 0
  %302 = vmatprep.subr.bf16.mxu0 0
  %303 = vmatpush2.bf16.msra.mxu0 0
  %304 = vmatprep.subr.bf16.mxu0 0
  %305 = vmatpush2.bf16.msra.mxu0 0
  %306 = vmatprep.subr.bf16.mxu0 0
  %307 = vmatpush2.bf16.msra.mxu0 0
  %308 = vmatprep.subr.bf16.mxu0 0
  %309 = vmatpush2.bf16.msra.mxu0 0
  %310 = vmatprep.subr.bf16.mxu0 0
  %311 = vmatpush2.bf16.msra.mxu0 0
  %312 = vmatprep.subr.bf16.mxu0 0
  %313 = vmatpush2.bf16.msra.mxu0 0
  %314 = vmatprep.subr.bf16.mxu0 0
  %315 = vmatpush2.bf16.msra.mxu0 0
  %316 = vmatprep.mubr.bf16.mxu0 0
  %317 = vmatmul.mubr.bf16.gmra.mxu0 %v273
  %v318 = vpop.f32.mrf.mxu0
  %v319 = vadd.f32 0.0, %v318
  %v320 = vpop.f32.mrf.mxu0
  %v321 = vpop.f32.mrf.mxu0
  %v322 = vadd.f32 0.0, %v321
  %v323 = vpop.f32.mrf.mxu0
  %324 = vmatprep.mubr.bf16.mxu0 0
  %325 = vmatmul.mubr.bf16.gmra.mxu0 %v276
  %v326 = vpop.f32.mrf.mxu0
  %v327 = vadd.f32 0.0, %v326
  %v328 = vpop.f32.mrf.mxu0
  %v329 = vpop.f32.mrf.mxu0
  %v330 = vadd.f32 0.0, %v329
  %v331 = vpop.f32.mrf.mxu0
  %332 = vmatprep.mubr.bf16.mxu0 0
  %333 = vmatmul.mubr.bf16.gmra.mxu0 %v279
  %v334 = vpop.f32.mrf.mxu0
  %v335 = vadd.f32 0.0, %v334
  %v336 = vpop.f32.mrf.mxu0
  %v337 = vpop.f32.mrf.mxu0
  %v338 = vadd.f32 0.0, %v337
  %v339 = vpop.f32.mrf.mxu0
  %340 = vmatprep.mubr.bf16.mxu0 0
  %341 = vmatmul.mubr.bf16.gmra.mxu0 %v282
  %v342 = vpop.f32.mrf.mxu0
  %v343 = vadd.f32 0.0, %v342
  %v344 = vpop.f32.mrf.mxu0
  %v345 = vpop.f32.mrf.mxu0
  %v346 = vadd.f32 0.0, %v345
  %v347 = vpop.f32.mrf.mxu0
  %348 = vdwg.mxu0
  %v349 = vld [vmem:[%s3] sm:$0xf]
  %v350 = vld [vmem:[%s3 + $0x4] sm:$0xf]
  %v351 = vld [vmem:[%s7] sm:$0xf]
  %v352 = vld [vmem:[%s7 + $0x4] sm:$0xf]
  %v353 = vld [vmem:[%s7 + $0x8] sm:$0xf]
  %v354 = vld [vmem:[%s7 + $0xc] sm:$0xf]
  %v357 = vunpack.c.l.b16 %v349
  %v358 = vunpack.c.l.b16 %v350
  %v359 = vpack.c.b16 %v358, %v357
  %v364 = vunpack.c.l.b16 %v351
  %v365 = vunpack.c.l.b16 %v352
  %v366 = vunpack.c.l.b16 %v353
  %v367 = vunpack.c.l.b16 %v354
  %v368 = vpack.c.b16 %v365, %v364
  %v369 = vpack.c.b16 %v367, %v366
  %v373 = vsel %vm271, %v359, 0
  %375 = vmatprep.subr.bf16.mxu0 0
  %376 = vmatpush1.bf16.msra.mxu0 0
  %377 = vmatprep.subr.bf16.mxu0 0
  %378 = vmatpush1.bf16.msra.mxu0 0
  %379 = vmatprep.subr.bf16.mxu0 0
  %380 = vmatpush1.bf16.msra.mxu0 0
  %381 = vmatprep.subr.bf16.mxu0 0
  %382 = vmatpush1.bf16.msra.mxu0 0
  %383 = vmatprep.subr.bf16.mxu0 0
  %384 = vmatpush1.bf16.msra.mxu0 0
  %385 = vmatprep.subr.bf16.mxu0 0
  %386 = vmatpush1.bf16.msra.mxu0 0
  %387 = vmatprep.subr.bf16.mxu0 0
  %388 = vmatpush1.bf16.msra.mxu0 %v369
  %389 = vmatprep.subr.bf16.mxu0 0
  %390 = vmatpush1.bf16.msra.mxu0 %v368
  %391 = vmatprep.subr.bf16.mxu0 0
  %392 = vmatpush2.bf16.msra.mxu0 0
  %393 = vmatprep.subr.bf16.mxu0 0
  %394 = vmatpush2.bf16.msra.mxu0 0
  %395 = vmatprep.subr.bf16.mxu0 0
  %396 = vmatpush2.bf16.msra.mxu0 0
  %397 = vmatprep.subr.bf16.mxu0 0
  %398 = vmatpush2.bf16.msra.mxu0 0
  %399 = vmatprep.subr.bf16.mxu0 0
  %400 = vmatpush2.bf16.msra.mxu0 0
  %401 = vmatprep.subr.bf16.mxu0 0
  %402 = vmatpush2.bf16.msra.mxu0 0
  %403 = vmatprep.subr.bf16.mxu0 0
  %404 = vmatpush2.bf16.msra.mxu0 0
  %405 = vmatprep.subr.bf16.mxu0 0
  %406 = vmatpush2.bf16.msra.mxu0 0
  %407 = vmatprep.mubr.bf16.mxu0 0
  %408 = vmatmul.mubr.bf16.gmra.mxu0 %v373
  %v409 = vpop.f32.mrf.mxu0
  %v410 = vadd.f32 0.0, %v409
  %v411 = vpop.f32.mrf.mxu0
  %v412 = vpop.f32.mrf.mxu0
  %v413 = vadd.f32 0.0, %v412
  %v414 = vpop.f32.mrf.mxu0
  %415 = vdwg.mxu0
  %v416 = vpack.c.bf16 %v413, %v410
  %v417 = vld [vmem:[%s8] sm:$0xf]
  %v418 = vld [vmem:[%s8 + $0x4] sm:$0xf]
  %v419 = vld [vmem:[%s8 + $0x8] sm:$0xf]
  %v420 = vld [vmem:[%s8 + $0xc] sm:$0xf]
  %v425 = vunpack.c.l.b16 %v417
  %v426 = vunpack.c.l.b16 %v418
  %v427 = vunpack.c.l.b16 %v419
  %v428 = vunpack.c.l.b16 %v420
  %v429 = vpack.c.b16 %v426, %v425
  %v430 = vpack.c.b16 %v428, %v427
  %433 = vmatprep.subr.bf16.mxu0 0
  %434 = vmatpush1.bf16.msra.mxu0 0
  %435 = vmatprep.subr.bf16.mxu0 0
  %436 = vmatpush1.bf16.msra.mxu0 0
  %437 = vmatprep.subr.bf16.mxu0 0
  %438 = vmatpush1.bf16.msra.mxu0 0
  %439 = vmatprep.subr.bf16.mxu0 0
  %440 = vmatpush1.bf16.msra.mxu0 0
  %441 = vmatprep.subr.bf16.mxu0 0
  %442 = vmatpush1.bf16.msra.mxu0 0
  %443 = vmatprep.subr.bf16.mxu0 0
  %444 = vmatpush1.bf16.msra.mxu0 0
  %445 = vmatprep.subr.bf16.mxu0 0
  %446 = vmatpush1.bf16.msra.mxu0 %v430
  %447 = vmatprep.subr.bf16.mxu0 0
  %448 = vmatpush1.bf16.msra.mxu0 %v429
  %449 = vmatprep.subr.bf16.mxu0 0
  %450 = vmatpush2.bf16.msra.mxu0 0
  %451 = vmatprep.subr.bf16.mxu0 0
  %452 = vmatpush2.bf16.msra.mxu0 0
  %453 = vmatprep.subr.bf16.mxu0 0
  %454 = vmatpush2.bf16.msra.mxu0 0
  %455 = vmatprep.subr.bf16.mxu0 0
  %456 = vmatpush2.bf16.msra.mxu0 0
  %457 = vmatprep.subr.bf16.mxu0 0
  %458 = vmatpush2.bf16.msra.mxu0 0
  %459 = vmatprep.subr.bf16.mxu0 0
  %460 = vmatpush2.bf16.msra.mxu0 0
  %461 = vmatprep.subr.bf16.mxu0 0
  %462 = vmatpush2.bf16.msra.mxu0 0
  %463 = vmatprep.subr.bf16.mxu0 0
  %464 = vmatpush2.bf16.msra.mxu0 0
  %465 = vmatprep.mubr.bf16.mxu0 0
  %466 = vmatmul.mubr.bf16.gmra.mxu0 %v373
  %v467 = vpop.f32.mrf.mxu0
  %v468 = vadd.f32 0.0, %v467
  %v469 = vpop.f32.mrf.mxu0
  %v470 = vpop.f32.mrf.mxu0
  %v471 = vadd.f32 0.0, %v470
  %v472 = vpop.f32.mrf.mxu0
  %473 = vdwg.mxu0
  %v474 = vpack.c.bf16 %v471, %v468
  %v475 = vpack.c.bf16 %v322, %v319
  %v476 = vpack.c.bf16 %v330, %v327
  %v477 = vpack.c.bf16 %v338, %v335
  %v478 = vpack.c.bf16 %v346, %v343
  %v480 = vsel %vm271, %v475, 0
  %v483 = vsel %vm271, %v476, 0
  %v486 = vsel %vm271, %v477, 0
  %v489 = vsel %vm271, %v478, 0
  %v492 = vsel %vm271, %v416, 0
  %494 = vmatprep.subr.bf16.mxu0 0
  %495 = vmatpush1.bf16.xpose.msra.mxu0 0
  %496 = vmatprep.subr.bf16.mxu0 0
  %497 = vmatpush1.bf16.xpose.msra.mxu0 0
  %498 = vmatprep.subr.bf16.mxu0 0
  %499 = vmatpush1.bf16.xpose.msra.mxu0 0
  %500 = vmatprep.subr.bf16.mxu0 0
  %501 = vmatpush1.bf16.xpose.msra.mxu0 0
  %502 = vmatprep.subr.bf16.mxu0 0
  %503 = vmatpush1.bf16.xpose.msra.mxu0 0
  %504 = vmatprep.subr.bf16.mxu0 0
  %505 = vmatpush1.bf16.xpose.msra.mxu0 0
  %506 = vmatprep.subr.bf16.mxu0 0
  %507 = vmatpush1.bf16.xpose.msra.mxu0 0
  %508 = vmatprep.subr.bf16.mxu0 0
  %509 = vmatpush1.bf16.xpose.msra.mxu0 %v492
  %510 = vmatprep.subr.bf16.mxu0 0
  %511 = vmatpush2.bf16.xpose.msra.mxu0 0
  %512 = vmatprep.subr.bf16.mxu0 0
  %513 = vmatpush2.bf16.xpose.msra.mxu0 0
  %514 = vmatprep.subr.bf16.mxu0 0
  %515 = vmatpush2.bf16.xpose.msra.mxu0 0
  %516 = vmatprep.subr.bf16.mxu0 0
  %517 = vmatpush2.bf16.xpose.msra.mxu0 0
  %518 = vmatprep.subr.bf16.mxu0 0
  %519 = vmatpush2.bf16.xpose.msra.mxu0 0
  %520 = vmatprep.subr.bf16.mxu0 0
  %521 = vmatpush2.bf16.xpose.msra.mxu0 0
  %522 = vmatprep.subr.bf16.mxu0 0
  %523 = vmatpush2.bf16.xpose.msra.mxu0 0
  %524 = vmatprep.subr.bf16.mxu0 0
  %525 = vmatpush2.bf16.xpose.msra.mxu0 0
  %526 = vmatprep.mubr.bf16.mxu0 0
  %527 = vmatmul.mubr.bf16.gmra.mxu0 %v480
  %v528 = vpop.f32.mrf.mxu0
  %v529 = vadd.f32 0.0, %v528
  %v530 = vpop.f32.mrf.mxu0
  %v531 = vpop.f32.mrf.mxu0
  %v532 = vadd.f32 0.0, %v531
  %v533 = vpop.f32.mrf.mxu0
  %534 = vmatprep.mubr.bf16.mxu0 0
  %535 = vmatmul.mubr.bf16.gmra.mxu0 %v483
  %v536 = vpop.f32.mrf.mxu0
  %v537 = vadd.f32 0.0, %v536
  %v538 = vpop.f32.mrf.mxu0
  %v539 = vpop.f32.mrf.mxu0
  %v540 = vadd.f32 0.0, %v539
  %v541 = vpop.f32.mrf.mxu0
  %542 = vmatprep.mubr.bf16.mxu0 0
  %543 = vmatmul.mubr.bf16.gmra.mxu0 %v486
  %v544 = vpop.f32.mrf.mxu0
  %v545 = vadd.f32 0.0, %v544
  %v546 = vpop.f32.mrf.mxu0
  %v547 = vpop.f32.mrf.mxu0
  %v548 = vadd.f32 0.0, %v547
  %v549 = vpop.f32.mrf.mxu0
  %550 = vmatprep.mubr.bf16.mxu0 0
  %551 = vmatmul.mubr.bf16.gmra.mxu0 %v489
  %v552 = vpop.f32.mrf.mxu0
  %v553 = vadd.f32 0.0, %v552
  %v554 = vpop.f32.mrf.mxu0
  %v555 = vpop.f32.mrf.mxu0
  %v556 = vadd.f32 0.0, %v555
  %v557 = vpop.f32.mrf.mxu0
  %558 = vdwg.mxu0
  %v559 = vmul.f32 %v529, 0.17677669
  %v560 = vmul.f32 %v532, 0.17677669
  %v561 = vmul.f32 %v537, 0.17677669
  %v562 = vmul.f32 %v540, 0.17677669
  %v563 = vmul.f32 %v545, 0.17677669
  %v564 = vmul.f32 %v548, 0.17677669
  %v565 = vmul.f32 %v553, 0.17677669
  %v566 = vmul.f32 %v556, 0.17677669
  %v567 = vld [vmem:[%s2] sm:$0xff]
  %v568 = vld [vmem:[%s2 + $0x8] sm:$0xff]
  %v569 = vld [vmem:[%s2 + $0x10] sm:$0xff]
  %v570 = vld [vmem:[%s2 + $0x18] sm:$0xff]
  %v571 = vld [vmem:[%s2 + $0x20] sm:$0xff]
  %v572 = vld [vmem:[%s2 + $0x28] sm:$0xff]
  %v573 = vld [vmem:[%s2 + $0x30] sm:$0xff]
  %v574 = vld [vmem:[%s2 + $0x38] sm:$0xff]
  %v575 = vadd.f32 %v559, %v567
  %v576 = vadd.f32 %v560, %v568
  %v577 = vadd.f32 %v561, %v569
  %v578 = vadd.f32 %v562, %v570
  %v579 = vadd.f32 %v563, %v571
  %v580 = vadd.f32 %v564, %v572
  %v581 = vadd.f32 %v565, %v573
  %v582 = vadd.f32 %v566, %v574
  %vm583 = vcmask 130048
  %v584 = vsel %vm583, %v575, -inf
  %585 = vmax.xlane.f32.xlu0 %v584
  %v586 = vpop.xlane.xlu0 %585
  %v587 = vsel %vm583, %v576, -inf
  %588 = vmax.xlane.f32.xlu0 %v587
  %v589 = vpop.xlane.xlu0 %588
  %v590 = vsel %vm583, %v577, -inf
  %591 = vmax.xlane.f32.xlu0 %v590
  %v592 = vpop.xlane.xlu0 %591
  %v593 = vsel %vm583, %v578, -inf
  %594 = vmax.xlane.f32.xlu0 %v593
  %v595 = vpop.xlane.xlu0 %594
  %v596 = vsel %vm583, %v579, -inf
  %597 = vmax.xlane.f32.xlu0 %v596
  %v598 = vpop.xlane.xlu0 %597
  %v599 = vsel %vm583, %v580, -inf
  %600 = vmax.xlane.f32.xlu0 %v599
  %v601 = vpop.xlane.xlu0 %600
  %v602 = vsel %vm583, %v581, -inf
  %603 = vmax.xlane.f32.xlu0 %v602
  %v604 = vpop.xlane.xlu0 %603
  %v605 = vsel %vm583, %v582, -inf
  %606 = vmax.xlane.f32.xlu0 %v605
  %v607 = vpop.xlane.xlu0 %606
  %v608 = vsub.f32 %v575, %v586
  %v609 = vsub.f32 %v576, %v589
  %v610 = vsub.f32 %v577, %v592
  %v611 = vsub.f32 %v578, %v595
  %v612 = vsub.f32 %v579, %v598
  %v613 = vsub.f32 %v580, %v601
  %v614 = vsub.f32 %v581, %v604
  %v615 = vsub.f32 %v582, %v607
  %v616 = vmul.f32 %v608, 1.442695
  %v617 = vpow.pop %v616
  %v618 = vmul.f32 %v609, 1.442695
  %v619 = vpow.pop %v618
  %v620 = vmul.f32 %v610, 1.442695
  %v621 = vpow.pop %v620
  %v622 = vmul.f32 %v611, 1.442695
  %v623 = vpow.pop %v622
  %v624 = vmul.f32 %v612, 1.442695
  %v625 = vpow.pop %v624
  %v626 = vmul.f32 %v613, 1.442695
  %v627 = vpow.pop %v626
  %v628 = vmul.f32 %v614, 1.442695
  %v629 = vpow.pop %v628
  %v630 = vmul.f32 %v615, 1.442695
  %v631 = vpow.pop %v630
  %v632 = vsel %vm583, %v617, 0.0
  %633 = vadd.xlane.f32.xlu0 %v632
  %v634 = vpop.xlane.xlu0 %633
  %v635 = vsel %vm583, %v619, 0.0
  %636 = vadd.xlane.f32.xlu0 %v635
  %v637 = vpop.xlane.xlu0 %636
  %v638 = vsel %vm583, %v621, 0.0
  %639 = vadd.xlane.f32.xlu0 %v638
  %v640 = vpop.xlane.xlu0 %639
  %v641 = vsel %vm583, %v623, 0.0
  %642 = vadd.xlane.f32.xlu0 %v641
  %v643 = vpop.xlane.xlu0 %642
  %v644 = vsel %vm583, %v625, 0.0
  %645 = vadd.xlane.f32.xlu0 %v644
  %v646 = vpop.xlane.xlu0 %645
  %v647 = vsel %vm583, %v627, 0.0
  %648 = vadd.xlane.f32.xlu0 %v647
  %v649 = vpop.xlane.xlu0 %648
  %v650 = vsel %vm583, %v629, 0.0
  %651 = vadd.xlane.f32.xlu0 %v650
  %v652 = vpop.xlane.xlu0 %651
  %v653 = vsel %vm583, %v631, 0.0
  %654 = vadd.xlane.f32.xlu0 %v653
  %v655 = vpop.xlane.xlu0 %654
  %v656 = vrcp.pop %v634
  %v657 = vrcp.pop %v637
  %v658 = vrcp.pop %v640
  %v659 = vrcp.pop %v643
  %v660 = vrcp.pop %v646
  %v661 = vrcp.pop %v649
  %v662 = vrcp.pop %v652
  %v663 = vrcp.pop %v655
  %v664 = vmul.f32 %v617, %v656
  %v665 = vmul.f32 %v619, %v657
  %v666 = vmul.f32 %v621, %v658
  %v667 = vmul.f32 %v623, %v659
  %v668 = vmul.f32 %v625, %v660
  %v669 = vmul.f32 %v627, %v661
  %v670 = vmul.f32 %v629, %v662
  %v671 = vmul.f32 %v631, %v663
  %v672 = vpack.c.bf16 %v665, %v664
  %v673 = vpack.c.bf16 %v667, %v666
  %v674 = vpack.c.bf16 %v669, %v668
  %v675 = vpack.c.bf16 %v671, %v670
  %v677 = vsel %vm583, %v672, 0
  %v680 = vsel %vm583, %v673, 0
  %v683 = vsel %vm583, %v674, 0
  %v686 = vsel %vm583, %v675, 0
  %688 = vmatprep.subr.bf16.mxu0 0
  %689 = vmatpush1.bf16.msra.mxu0 0
  %690 = vmatprep.subr.bf16.mxu0 0
  %691 = vmatpush1.bf16.msra.mxu0 0
  %692 = vmatprep.subr.bf16.mxu0 0
  %693 = vmatpush1.bf16.msra.mxu0 0
  %694 = vmatprep.subr.bf16.mxu0 0
  %695 = vmatpush1.bf16.msra.mxu0 0
  %696 = vmatprep.subr.bf16.mxu0 0
  %697 = vmatpush1.bf16.msra.mxu0 0
  %698 = vmatprep.subr.bf16.mxu0 0
  %699 = vmatpush1.bf16.msra.mxu0 0
  %700 = vmatprep.subr.bf16.mxu0 0
  %701 = vmatpush1.bf16.msra.mxu0 0
  %702 = vmatprep.subr.bf16.mxu0 0
  %703 = vmatpush1.bf16.msra.mxu0 %v474
  %704 = vmatprep.subr.bf16.mxu0 0
  %705 = vmatpush2.bf16.msra.mxu0 0
  %706 = vmatprep.subr.bf16.mxu0 0
  %707 = vmatpush2.bf16.msra.mxu0 0
  %708 = vmatprep.subr.bf16.mxu0 0
  %709 = vmatpush2.bf16.msra.mxu0 0
  %710 = vmatprep.subr.bf16.mxu0 0
  %711 = vmatpush2.bf16.msra.mxu0 0
  %712 = vmatprep.subr.bf16.mxu0 0
  %713 = vmatpush2.bf16.msra.mxu0 0
  %714 = vmatprep.subr.bf16.mxu0 0
  %715 = vmatpush2.bf16.msra.mxu0 0
  %716 = vmatprep.subr.bf16.mxu0 0
  %717 = vmatpush2.bf16.msra.mxu0 0
  %718 = vmatprep.subr.bf16.mxu0 0
  %719 = vmatpush2.bf16.msra.mxu0 0
  %720 = vmatprep.mubr.bf16.mxu0 0
  %721 = vmatmul.mubr.bf16.gmra.mxu0 %v677
  %v722 = vpop.f32.mrf.mxu0
  %v723 = vadd.f32 0.0, %v722
  %v724 = vpop.f32.mrf.mxu0
  %v725 = vpop.f32.mrf.mxu0
  %v726 = vadd.f32 0.0, %v725
  %v727 = vpop.f32.mrf.mxu0
  %728 = vmatprep.mubr.bf16.mxu0 0
  %729 = vmatmul.mubr.bf16.gmra.mxu0 %v680
  %v730 = vpop.f32.mrf.mxu0
  %v731 = vadd.f32 0.0, %v730
  %v732 = vpop.f32.mrf.mxu0
  %v733 = vpop.f32.mrf.mxu0
  %v734 = vadd.f32 0.0, %v733
  %v735 = vpop.f32.mrf.mxu0
  %736 = vmatprep.mubr.bf16.mxu0 0
  %737 = vmatmul.mubr.bf16.gmra.mxu0 %v683
  %v738 = vpop.f32.mrf.mxu0
  %v739 = vadd.f32 0.0, %v738
  %v740 = vpop.f32.mrf.mxu0
  %v741 = vpop.f32.mrf.mxu0
  %v742 = vadd.f32 0.0, %v741
  %v743 = vpop.f32.mrf.mxu0
  %744 = vmatprep.mubr.bf16.mxu0 0
  %745 = vmatmul.mubr.bf16.gmra.mxu0 %v686
  %v746 = vpop.f32.mrf.mxu0
  %v747 = vadd.f32 0.0, %v746
  %v748 = vpop.f32.mrf.mxu0
  %v749 = vpop.f32.mrf.mxu0
  %v750 = vadd.f32 0.0, %v749
  %v751 = vpop.f32.mrf.mxu0
  %752 = vdwg.mxu0
  %v753 = vld [vmem:[%s1] sm:$0xff]
  %v754 = vld [vmem:[%s1 + $0x8] sm:$0xff]
  %v755 = vld [vmem:[%s1 + $0x10] sm:$0xff]
  %v756 = vld [vmem:[%s1 + $0x18] sm:$0xff]
  %v757 = vld [vmem:[%s1 + $0x20] sm:$0xff]
  %v758 = vld [vmem:[%s1 + $0x28] sm:$0xff]
  %v759 = vld [vmem:[%s1 + $0x30] sm:$0xff]
  %v760 = vld [vmem:[%s1 + $0x38] sm:$0xff]
  %v761 = vpack.c.bf16 %v726, %v723
  %v762 = vpack.c.bf16 %v734, %v731
  %v763 = vpack.c.bf16 %v742, %v739
  %v764 = vpack.c.bf16 %v750, %v747
  %v765 = vld [vmem:[%s9] sm:$0xf]
  %v766 = vld [vmem:[%s9 + $0x4] sm:$0xf]
  %v767 = vld [vmem:[%s9 + $0x8] sm:$0xf]
  %v768 = vld [vmem:[%s9 + $0xc] sm:$0xf]
  %v773 = vunpack.c.l.b16 %v765
  %v774 = vunpack.c.l.b16 %v766
  %v775 = vunpack.c.l.b16 %v767
  %v776 = vunpack.c.l.b16 %v768
  %v777 = vpack.c.b16 %v774, %v773
  %v778 = vpack.c.b16 %v776, %v775
  %v782 = vsel %vm271, %v761, 0
  %v785 = vsel %vm271, %v762, 0
  %v788 = vsel %vm271, %v763, 0
  %v791 = vsel %vm271, %v764, 0
  %793 = vmatprep.subr.bf16.mxu0 0
  %794 = vmatpush1.bf16.msra.mxu0 0
  %795 = vmatprep.subr.bf16.mxu0 0
  %796 = vmatpush1.bf16.msra.mxu0 0
  %797 = vmatprep.subr.bf16.mxu0 0
  %798 = vmatpush1.bf16.msra.mxu0 0
  %799 = vmatprep.subr.bf16.mxu0 0
  %800 = vmatpush1.bf16.msra.mxu0 0
  %801 = vmatprep.subr.bf16.mxu0 0
  %802 = vmatpush1.bf16.msra.mxu0 0
  %803 = vmatprep.subr.bf16.mxu0 0
  %804 = vmatpush1.bf16.msra.mxu0 0
  %805 = vmatprep.subr.bf16.mxu0 0
  %806 = vmatpush1.bf16.msra.mxu0 %v778
  %807 = vmatprep.subr.bf16.mxu0 0
  %808 = vmatpush1.bf16.msra.mxu0 %v777
  %809 = vmatprep.subr.bf16.mxu0 0
  %810 = vmatpush2.bf16.msra.mxu0 0
  %811 = vmatprep.subr.bf16.mxu0 0
  %812 = vmatpush2.bf16.msra.mxu0 0
  %813 = vmatprep.subr.bf16.mxu0 0
  %814 = vmatpush2.bf16.msra.mxu0 0
  %815 = vmatprep.subr.bf16.mxu0 0
  %816 = vmatpush2.bf16.msra.mxu0 0
  %817 = vmatprep.subr.bf16.mxu0 0
  %818 = vmatpush2.bf16.msra.mxu0 0
  %819 = vmatprep.subr.bf16.mxu0 0
  %820 = vmatpush2.bf16.msra.mxu0 0
  %821 = vmatprep.subr.bf16.mxu0 0
  %822 = vmatpush2.bf16.msra.mxu0 0
  %823 = vmatprep.subr.bf16.mxu0 0
  %824 = vmatpush2.bf16.msra.mxu0 0
  %825 = vmatprep.mubr.bf16.mxu0 0
  %826 = vmatmul.mubr.bf16.gmra.mxu0 %v782
  %v827 = vpop.f32.mrf.mxu0
  %v828 = vadd.f32 0.0, %v827
  %v829 = vpop.f32.mrf.mxu0
  %v830 = vpop.f32.mrf.mxu0
  %v831 = vadd.f32 0.0, %v830
  %v832 = vpop.f32.mrf.mxu0
  %833 = vmatprep.mubr.bf16.mxu0 0
  %834 = vmatmul.mubr.bf16.gmra.mxu0 %v785
  %v835 = vpop.f32.mrf.mxu0
  %v836 = vadd.f32 0.0, %v835
  %v837 = vpop.f32.mrf.mxu0
  %v838 = vpop.f32.mrf.mxu0
  %v839 = vadd.f32 0.0, %v838
  %v840 = vpop.f32.mrf.mxu0
  %841 = vmatprep.mubr.bf16.mxu0 0
  %842 = vmatmul.mubr.bf16.gmra.mxu0 %v788
  %v843 = vpop.f32.mrf.mxu0
  %v844 = vadd.f32 0.0, %v843
  %v845 = vpop.f32.mrf.mxu0
  %v846 = vpop.f32.mrf.mxu0
  %v847 = vadd.f32 0.0, %v846
  %v848 = vpop.f32.mrf.mxu0
  %849 = vmatprep.mubr.bf16.mxu0 0
  %850 = vmatmul.mubr.bf16.gmra.mxu0 %v791
  %v851 = vpop.f32.mrf.mxu0
  %v852 = vadd.f32 0.0, %v851
  %v853 = vpop.f32.mrf.mxu0
  %v854 = vpop.f32.mrf.mxu0
  %v855 = vadd.f32 0.0, %v854
  %v856 = vpop.f32.mrf.mxu0
  %857 = vdwg.mxu0
  %859 = vset.pattern.permute.xlu0 0
  %860 = vperm.xlu0 %859, %v753
  %v861 = vpop.permute.xlu0 %860
  %864 = vset.pattern.permute.xlu0 0
  %865 = vperm.xlu0 %864, %v754
  %v866 = vpop.permute.xlu0 %865
  %869 = vset.pattern.permute.xlu0 0
  %870 = vperm.xlu0 %869, %v755
  %v871 = vpop.permute.xlu0 %870
  %874 = vset.pattern.permute.xlu0 0
  %875 = vperm.xlu0 %874, %v756
  %v876 = vpop.permute.xlu0 %875
  %879 = vset.pattern.permute.xlu0 0
  %880 = vperm.xlu0 %879, %v757
  %v881 = vpop.permute.xlu0 %880
  %884 = vset.pattern.permute.xlu0 0
  %885 = vperm.xlu0 %884, %v758
  %v886 = vpop.permute.xlu0 %885
  %889 = vset.pattern.permute.xlu0 0
  %890 = vperm.xlu0 %889, %v759
  %v891 = vpop.permute.xlu0 %890
  %894 = vset.pattern.permute.xlu0 0
  %895 = vperm.xlu0 %894, %v760
  %v896 = vpop.permute.xlu0 %895
  %v898 = vmul.f32 %v861, %v828
  %v899 = vmul.f32 %v866, %v831
  %v900 = vmul.f32 %v871, %v836
  %v901 = vmul.f32 %v876, %v839
  %v902 = vmul.f32 %v881, %v844
  %v903 = vmul.f32 %v886, %v847
  %v904 = vmul.f32 %v891, %v852
  %v905 = vmul.f32 %v896, %v855
  %v906 = vadd.f32 %v243, %v898
  %v907 = vadd.f32 %v244, %v899
  %v908 = vadd.f32 %v245, %v900
  %v909 = vadd.f32 %v246, %v901
  %v910 = vadd.f32 %v247, %v902
  %v911 = vadd.f32 %v248, %v903
  %v912 = vadd.f32 %v249, %v904
  %v913 = vadd.f32 %v250, %v905
  %v914 = vpack.c.bf16 %v907, %v906
  %v915 = vpack.c.bf16 %v909, %v908
  %v916 = vpack.c.bf16 %v911, %v910
  %v917 = vpack.c.bf16 %v913, %v912
  %v918 = vld [vmem:[%s10] sm:$0xf]
  %v919 = vld [vmem:[%s10 + $0x4] sm:$0xf]
  %v920 = vld [vmem:[%s10 + $0x8] sm:$0xf]
  %v921 = vld [vmem:[%s10 + $0xc] sm:$0xf]
  %v922 = vld [vmem:[%s11] sm:$0x1]
  %v924 = vlaneseq
  %v925 = vshrl.u32 %v924, 7
  %v926 = vsub.s32 0, %v925
  %v927 = vrot.slane %v922, %v926
  %v933 = vunpack.c.l.b16 %v918
  %v934 = vunpack.c.l.b16 %v919
  %v935 = vunpack.c.l.b16 %v920
  %v936 = vunpack.c.l.b16 %v921
  %v937 = vpack.c.b16 %v934, %v933
  %v938 = vpack.c.b16 %v936, %v935
  %v942 = vsel %vm271, %v914, 0
  %v945 = vsel %vm271, %v915, 0
  %v948 = vsel %vm271, %v916, 0
  %v951 = vsel %vm271, %v917, 0
  %953 = vmatprep.subr.bf16.mxu0 0
  %954 = vmatpush1.bf16.msra.mxu0 0
  %955 = vmatprep.subr.bf16.mxu0 0
  %956 = vmatpush1.bf16.msra.mxu0 0
  %957 = vmatprep.subr.bf16.mxu0 0
  %958 = vmatpush1.bf16.msra.mxu0 0
  %959 = vmatprep.subr.bf16.mxu0 0
  %960 = vmatpush1.bf16.msra.mxu0 0
  %961 = vmatprep.subr.bf16.mxu0 0
  %962 = vmatpush1.bf16.msra.mxu0 0
  %963 = vmatprep.subr.bf16.mxu0 0
  %964 = vmatpush1.bf16.msra.mxu0 0
  %965 = vmatprep.subr.bf16.mxu0 0
  %966 = vmatpush1.bf16.msra.mxu0 %v938
  %967 = vmatprep.subr.bf16.mxu0 0
  %968 = vmatpush1.bf16.msra.mxu0 %v937
  %969 = vmatprep.subr.bf16.mxu0 0
  %970 = vmatpush2.bf16.msra.mxu0 0
  %971 = vmatprep.subr.bf16.mxu0 0
  %972 = vmatpush2.bf16.msra.mxu0 0
  %973 = vmatprep.subr.bf16.mxu0 0
  %974 = vmatpush2.bf16.msra.mxu0 0
  %975 = vmatprep.subr.bf16.mxu0 0
  %976 = vmatpush2.bf16.msra.mxu0 0
  %977 = vmatprep.subr.bf16.mxu0 0
  %978 = vmatpush2.bf16.msra.mxu0 0
  %979 = vmatprep.subr.bf16.mxu0 0
  %980 = vmatpush2.bf16.msra.mxu0 0
  %981 = vmatprep.subr.bf16.mxu0 0
  %982 = vmatpush2.bf16.msra.mxu0 0
  %983 = vmatprep.subr.bf16.mxu0 0
  %984 = vmatpush2.bf16.msra.mxu0 0
  %985 = vmatprep.mubr.bf16.mxu0 0
  %986 = vmatmul.mubr.bf16.gmra.mxu0 %v942
  %v987 = vpop.f32.mrf.mxu0
  %v988 = vadd.f32 %v927, %v987
  %v989 = vpop.f32.mrf.mxu0
  %v990 = vpop.f32.mrf.mxu0
  %v991 = vadd.f32 %v927, %v990
  %v992 = vpop.f32.mrf.mxu0
  %993 = vmatprep.mubr.bf16.mxu0 0
  %994 = vmatmul.mubr.bf16.gmra.mxu0 %v945
  %v995 = vpop.f32.mrf.mxu0
  %v996 = vadd.f32 %v927, %v995
  %v997 = vpop.f32.mrf.mxu0
  %v998 = vpop.f32.mrf.mxu0
  %v999 = vadd.f32 %v927, %v998
  %v1000 = vpop.f32.mrf.mxu0
  %1001 = vmatprep.mubr.bf16.mxu0 0
  %1002 = vmatmul.mubr.bf16.gmra.mxu0 %v948
  %v1003 = vpop.f32.mrf.mxu0
  %v1004 = vadd.f32 %v927, %v1003
  %v1005 = vpop.f32.mrf.mxu0
  %v1006 = vpop.f32.mrf.mxu0
  %v1007 = vadd.f32 %v927, %v1006
  %v1008 = vpop.f32.mrf.mxu0
  %1009 = vmatprep.mubr.bf16.mxu0 0
  %1010 = vmatmul.mubr.bf16.gmra.mxu0 %v951
  %v1011 = vpop.f32.mrf.mxu0
  %v1012 = vadd.f32 %v927, %v1011
  %v1013 = vpop.f32.mrf.mxu0
  %v1014 = vpop.f32.mrf.mxu0
  %v1015 = vadd.f32 %v927, %v1014
  %v1016 = vpop.f32.mrf.mxu0
  %1017 = vdwg.mxu0
  %1018 = vst [vmem:[%s12] sm:$0xff] %v988
  %1019 = vst [vmem:[%s12 + $0x8] sm:$0xff] %v991
  %1020 = vst [vmem:[%s12 + $0x10] sm:$0xff] %v996
  %1021 = vst [vmem:[%s12 + $0x18] sm:$0xff] %v999
  %1022 = vst [vmem:[%s12 + $0x20] sm:$0xff] %v1004
  %1023 = vst [vmem:[%s12 + $0x28] sm:$0xff] %v1007
  %1024 = vst [vmem:[%s12 + $0x30] sm:$0xff] %v1012
  %1025 = vst [vmem:[%s12 + $0x38] sm:$0xff] %v1015
  // Predicated region
  $region50: #{conditioned_diffusion_forward.1} parent=0 // pred_check
    _
  $region51: #{conditioned_diffusion_forward.1} parent=0 // pred_check_branch
    %1027 = sbr.rel (0) target = $region53
  $region52: #{conditioned_diffusion_forward.1} parent=0 // pred_region
    _
  $region53: #{conditioned_diffusion_forward.1} parent=0 // pred_fallthru
    _
  // Predicated region
  $region54: #{conditioned_diffusion_forward.1} parent=0 // pred_check
    _
  $region55: #{conditioned_diffusion_forward.1} parent=0 // pred_check_branch
    %1029 = sbr.rel (0) target = $region57
  $region56: #{conditioned_diffusion_forward.1} parent=0 // pred_region
    _
  $region57: #{conditioned_diffusion_forward.1} parent=0 // pred_fallthru
    _

</llo_original>
